<compile_context>
chip_gen: v6e
topology: v6e:2x2x1
jax: 0.10.0
libtpu: 0.0.40
codegen_flags: <defaults>
</compile_context>

<pallas_src>
import math

import jax
import jax.numpy as jnp
from jax.experimental import pallas as pl
from jax.experimental.pallas import tpu as pltpu


def _resolve_shape(total, shape):
    """Resolve a torch-style view shape (single -1 allowed), in pure Python."""
    shape = [int(s) for s in shape]
    neg = [i for i, s in enumerate(shape) if s == -1]
    if len(neg) > 1:
        raise ValueError("only one dimension may be -1 in a view shape")
    if neg:
        known = math.prod(s for s in shape if s != -1)
        if known <= 0 or total % known != 0:
            raise ValueError(f"cannot view {total} elements as {tuple(shape)}")
        shape[neg[0]] = total // known
    if math.prod(shape) != total:
        raise ValueError(f"view size mismatch: {tuple(shape)} for {total} elements")
    return tuple(shape)


def _hbm_copy_kernel(x_hbm, o_hbm, sem):
    # One direct HBM->HBM DMA of the whole (already target-shaped) array.
    # No VMEM staging, no grid, no (8,128) tiling constraints.
    cp = pltpu.make_async_copy(x_hbm, o_hbm, sem)
    cp.start()
    cp.wait()


def _materialized_view(x, target_shape):
    """Materialize the view via a single HBM->HBM DMA inside a Pallas call."""
    # Metadata-only reshape so the DMA src/dst shapes match the target.
    x_t = jnp.reshape(x, target_shape)
    nbytes = x_t.size * jnp.dtype(x_t.dtype).itemsize
    return pl.pallas_call(
        _hbm_copy_kernel,
        out_shape=jax.ShapeDtypeStruct(target_shape, x.dtype),
        in_specs=[pl.BlockSpec(memory_space=pl.ANY)],   # raw HBM ref, no auto-DMA
        out_specs=pl.BlockSpec(memory_space=pl.ANY),    # raw HBM ref, no auto-DMA
        scratch_shapes=[pltpu.SemaphoreType.DMA],
        compiler_params=pltpu.CompilerParams(has_side_effects=True),
        # Purely memory-bound hint so XLA can overlap neighbors (e.g. the VGG
        # classifier matmul that follows the flatten) with this call.
        cost_estimate=pl.CostEstimate(
            flops=0, transcendentals=0, bytes_accessed=2 * nbytes
        ),
    )(x_t)


def view_module(x, *shape, force_copy=False):
    """Equivalent of View(*shape)(x), i.e. x.view(*shape).

    Default: metadata-only jnp.reshape (zero cost — a row-major view moves no
    bytes).  force_copy=True routes through a Pallas kernel that materializes
    the result with a single HBM->HBM DMA; only useful when an explicit
    custom-call boundary is required for scheduling.
    """
    target_shape = _resolve_shape(x.size, shape)
    if not force_copy:
        return jnp.reshape(x, target_shape)
    return _materialized_view(x, target_shape)


class View:
    """Mirror of the nn.Module interface."""

    def __init__(self, *shape):
        self.shape = shape

    def __call__(self, x, force_copy=False):
        return view_module(x, *self.shape, force_copy=force_copy)


if __name__ == "__main__":
    key = jax.random.PRNGKey(0)
    k0, k1 = jax.random.split(key)

    # Small NCHW conv-feature-like input: batch=2, channels=4, spatial=16x16.
    x = jax.random.normal(k0, (2, 4, 16, 16), dtype=jnp.float32)

    # VGG usage: View(x.size(0), -1) -> flatten to (2, 1024).
    flatten = View(x.shape[0], -1)

    # Default (review-preferred) path: pure metadata reshape.
    out_fast = jax.block_until_ready(flatten(x))
    assert out_fast.shape == (2, 4 * 16 * 16), out_fast.shape
    assert out_fast.dtype == x.dtype
    assert bool(jnp.array_equal(out_fast, x.reshape(x.shape[0], -1)))

    # Pallas kernel path (explicit custom-call boundary): single HBM->HBM DMA.
    out_kernel = jax.block_until_ready(flatten(x, force_copy=True))
    assert out_kernel.shape == (2, 4 * 16 * 16), out_kernel.shape
    assert out_kernel.dtype == x.dtype
    assert bool(jnp.array_equal(out_kernel, x.reshape(x.shape[0], -1)))

    # Non-flatten view on the same tensor through the kernel path: View(2,16,64).
    out2 = jax.block_until_ready(view_module(x, 2, 16, 64, force_copy=True))
    assert bool(jnp.array_equal(out2, x.reshape(2, 16, 64)))

    # Slightly larger input through the kernel path (still one DMA, no tiling).
    y = jax.random.normal(k1, (4, 16, 16, 16), dtype=jnp.float32)
    out3 = jax.block_until_ready(view_module(y, y.shape[0], -1, force_copy=True))
    assert out3.shape == (4, 16 * 16 * 16)
    assert bool(jnp.array_equal(out3, y.reshape(4, -1)))

    # Odd total (not a multiple of 128): same DMA path, no fragile fallback.
    z = jax.random.normal(k0, (2, 3, 5, 7), dtype=jnp.float32)
    out4 = jax.block_until_ready(view_module(z, 6, 35, force_copy=True))
    assert bool(jnp.array_equal(out4, z.reshape(6, 35)))

    print("KERNEL_OK")
</pallas_src>

<mosaic_0001>
module attributes {stable_mosaic.version = 11 : i64} {
  func.func @_hbm_copy_kernel(%arg0: memref<2x1024xf32, #tpu.memory_space<any>>, %arg1: memref<2x1024xf32, #tpu.memory_space<any>>, %arg2: memref<!tpu.dma_semaphore, #tpu.memory_space<semaphore_mem>>) attributes {dimension_semantics = [], scalar_prefetch = 0 : i64, scratch_operands = 1 : i64, tpu.core_type = #tpu.core_type<tc>} {
    tpu.enqueue_dma source(%arg0 : memref<2x1024xf32, #tpu.memory_space<any>>) target(%arg1 : memref<2x1024xf32, #tpu.memory_space<any>>) target_semaphore(%arg2 : memref<!tpu.dma_semaphore, #tpu.memory_space<semaphore_mem>>)
    tpu.wait_dma2 semaphore(%arg2 : memref<!tpu.dma_semaphore, #tpu.memory_space<semaphore_mem>>) src(%arg0 : memref<2x1024xf32, #tpu.memory_space<any>>) dst(%arg1 : memref<2x1024xf32, #tpu.memory_space<any>>)
    return
  }
}

</mosaic_0001>

<llo_original>
// kernel: tpu_custom_call.1
$region0: #{tpu_custom_call.1}
  #allocation0 [shape = 'u32[]', space=smem, size = 0x4, offset = 0x4, fixed_abs, tag = 'smem constant byte address 0x4 - core index']
  #allocation1 [shape = 'u32[144,128]{1,0:T(1,128)}', space=vmem, size = 0x12000, scoped, tag = 'internal scratch']
  #allocation2 [shape = 's32[1]{0}', space=sflag, size = 0x4, scoped, tag = 'scratch operand']
  #allocation3 [shape = 's32[]', space=sflag, size = 0x4, offset = 0, fixed_abs, tag = 'sflag constant byte address 0x0 - dummy sync flag']
  #allocation4 [shape = 'u32[0]{0}', space=smem, size = 0, offset = 0, fixed_abs, tag = 'smem constant byte address 0x0 - null']
  %s0 = inlined_call_operand.hbm [shape: f32[2,1024], index: 0, kind: input, shape index: {}]
  %s1 = inlined_call_operand.hbm [shape: f32[2,1024], index: 1, kind: output, shape index: {}]
  %s2 = sld [smem:[#allocation0]]
  $region2: #{tpu_custom_call.1} parent=0
    _
  %s4 = ssub.s32 1, %s2
  %s5 = scalar_select 0, %s4, %s2
  %s7 = sshll.u32 1, 14
  %s8 = sxor.u32 4294967295, %s7
  %12 = dma.general %s0, 256, %s1, [#allocation2], 131072, [#allocation4], 0, 0
  %s13 = smul.u32 2, 1
  %s14 = smul.u32 %s13, 8
  %s15 = sshll.u32 %s14, 4
  %16 = dma.done [#allocation2], %s15
  %17 = vsyncmov [#allocation2]
  %s18 = vpop.sfrf %17
  %p19 = scmp.eq.s32.totalorder %s18, 0
  %p20 = pneg %p19
  %22 = shalt.err (%p20)

</llo_original>
